<compile_context>
chip_gen: v7x
topology: tpu7x:2x2x1
jax: 0.10.0
libtpu: 0.0.40
codegen_flags: <defaults>
</compile_context>

<pallas_src>
import math
import functools

import numpy as np
import jax
import jax.numpy as jnp
from jax import lax
from jax.experimental import pallas as pl
from jax.experimental.pallas import tpu as pltpu


# --------------------------------------------------------------------------
# Buffer construction (deterministic, mirrors PositionalEncoding.__init__)
# --------------------------------------------------------------------------
def make_pos_embedding(emb_size: int, maxlen: int = 5000, dtype=jnp.float32):
    den = jnp.exp(
        -jnp.arange(0, emb_size, 2, dtype=jnp.float32) * math.log(10000.0) / emb_size
    )                                                     # (emb_size//2,)
    pos = jnp.arange(0, maxlen, dtype=jnp.float32).reshape(maxlen, 1)
    pe = jnp.zeros((maxlen, emb_size), dtype=jnp.float32)
    pe = pe.at[:, 0::2].set(jnp.sin(pos * den))
    pe = pe.at[:, 1::2].set(jnp.cos(pos * den))
    # NOTE: store this in the token-embedding dtype at module init so no
    # per-call cast pass over the (maxlen, 1, E) buffer is needed.
    return pe[:, None, :].astype(dtype)                   # (maxlen, 1, emb_size)


def _round_up(x: int, m: int) -> int:
    return (x + m - 1) // m * m


# --------------------------------------------------------------------------
# Kernel: out = dropout(x + pos_embedding[seq window])
# --------------------------------------------------------------------------
def _posenc_kernel(seed_ref, x_ref, pe_ref, o_ref, *,
                   dropout_p, training, tile_s, use_hw_prng):
    # x_ref: (TS, B, E), pe_ref: (TS, 1, E) -> broadcast add over batch axis.
    y = x_ref[...] + pe_ref[...]

    if training and dropout_p > 0.0:
        shape = x_ref.shape
        # keep iff bits >= thresh  =>  P(keep) = 1 - p  (uniform uint32 bits)
        thresh = np.uint32(min(int(round(dropout_p * float(1 << 32))),
                               (1 << 32) - 1))

        if use_hw_prng:
            # Hardware PRNG: one seed per grid block, random bits in ~1 op/vreg.
            pltpu.prng_seed(seed_ref[0] + pl.program_id(0))
            bits = pltpu.bitcast(pltpu.prng_random_bits(shape), jnp.uint32)
        else:
            # Portable fallback (CPU interpreter / non-TPU backends):
            # fmix32-style hash of the *global* element index, so the dropout
            # pattern is tiling-invariant and decorrelated across blocks.
            ts, b, e = shape
            u32 = jnp.uint32
            row = (lax.broadcasted_iota(u32, shape, 0)
                   + (pl.program_id(0) * tile_s).astype(u32))
            inner = (lax.broadcasted_iota(u32, shape, 1) * np.uint32(e)
                     + lax.broadcasted_iota(u32, shape, 2))
            h = row * np.uint32(b * e) + inner
            h = h ^ (seed_ref[0].astype(u32) * np.uint32(0x9E3779B9))
            h = h ^ (h >> 16)
            h = h * np.uint32(0x85EBCA6B)
            h = h ^ (h >> 13)
            h = h * np.uint32(0xC2B2AE35)
            h = h ^ (h >> 16)
            bits = h

        keep = bits >= thresh
        # Select/scale in f32, cast once on store (v5e has no bf16 VPU path;
        # also avoids bf16-rounded 1/(1-p) bias).
        scale = np.float32(1.0 / (1.0 - dropout_p))
        y = jnp.where(keep, y.astype(jnp.float32) * scale, np.float32(0.0))

    o_ref[...] = y.astype(o_ref.dtype)


# --------------------------------------------------------------------------
# Wrapper
# --------------------------------------------------------------------------
def positional_encoding(token_embedding, pos_embedding, *, dropout_p=0.1,
                        training=False, seed=0, use_hw_prng=None):
    S, B, E = token_embedding.shape
    maxlen = pos_embedding.shape[0]
    assert maxlen >= S, "pos_embedding maxlen must cover the sequence length"

    dtype = token_embedding.dtype
    if pos_embedding.dtype != dtype:
        # Prefer doing this once at init (see make_pos_embedding); kept as a
        # guard so semantics match for mismatched-dtype callers.
        pos_embedding = pos_embedding.astype(dtype)

    if use_hw_prng is None:
        # Hardware PRNG on real TPUs; portable hash elsewhere (interpreter).
        use_hw_prng = jax.default_backend() == "tpu"

    # ---- tile sizing with *padded* VMEM footprint ----------------------
    itemsize = jnp.dtype(dtype).itemsize
    sublane = {4: 8, 2: 16, 1: 32}.get(itemsize, 8)
    pad_b = _round_up(B, sublane)            # sublane axis of each (B, E) tile
    pad_e = _round_up(E, 128)                # lane axis
    row_bytes = pad_b * pad_e * itemsize     # padded bytes / seq-step (x, out)
    pe_row_bytes = sublane * pad_e * itemsize

    target_bytes = 4 * 1024 * 1024           # ~4 MiB x-block (padded)
    cand = max(1, target_bytes // row_bytes)
    if S > 1:
        # cap so the grid has >= 2 blocks (v7x: shard over both TensorCores)
        TS = int(min(cand, pl.cdiv(S, 2)))
    else:
        TS = 1
    TS = max(TS, 1)
    grid = (int(pl.cdiv(S, TS)),)

    # double-buffered x + out + pe, plus headroom
    vmem_needed = 2 * (2 * TS * row_bytes + TS * pe_row_bytes)
    vmem_limit = int(min(max(vmem_needed + (4 << 20), 16 << 20), 48 << 20))

    seed_arr = jnp.asarray([seed], dtype=jnp.int32)
    kernel = functools.partial(_posenc_kernel, dropout_p=float(dropout_p),
                               training=bool(training), tile_s=TS,
                               use_hw_prng=bool(use_hw_prng))

    grid_spec = pltpu.PrefetchScalarGridSpec(
        num_scalar_prefetch=1,
        grid=grid,
        in_specs=[
            pl.BlockSpec((TS, B, E), lambda i, seed: (i, 0, 0)),   # x
            pl.BlockSpec((TS, 1, E), lambda i, seed: (i, 0, 0)),   # pe window
        ],
        out_specs=pl.BlockSpec((TS, B, E), lambda i, seed: (i, 0, 0)),
    )

    cost = pl.CostEstimate(
        flops=2 * S * B * E,
        transcendentals=0,
        bytes_accessed=(2 * S * B * E + S * E) * itemsize,
    )

    # TODO(synk): if E % 128 != 0 the output stores become masked (vst.msk);
    # a wrapper-side lane-dense repack (e.g. (S, B*E) when B*E % 128 == 0)
    # would avoid that -- E is a model hyper-parameter here.
    return pl.pallas_call(
        kernel,
        out_shape=jax.ShapeDtypeStruct((S, B, E), dtype),
        grid_spec=grid_spec,
        compiler_params=pltpu.CompilerParams(
            dimension_semantics=("parallel",),     # shard seq blocks on v7x
            vmem_limit_bytes=vmem_limit),
        cost_estimate=cost,
    )(seed_arr, token_embedding, pos_embedding)


# --------------------------------------------------------------------------
# Demo / self-check
# --------------------------------------------------------------------------
if __name__ == "__main__":
    SEQ, BATCH, EMB = 8, 2, 128          # E multiple of 128 -> lane-dense stores
    DROPOUT_P = 0.1

    key = jax.random.PRNGKey(0)
    token_embedding = jax.random.normal(key, (SEQ, BATCH, EMB), dtype=jnp.float32)
    pos_embedding = make_pos_embedding(EMB, maxlen=64)   # small maxlen for demo

    # eval-mode forward (dropout is identity, matching module.eval())
    out = positional_encoding(token_embedding, pos_embedding,
                              dropout_p=DROPOUT_P, training=False)
    out = jax.block_until_ready(out)

    ref = token_embedding + pos_embedding[:SEQ]
    assert out.shape == (SEQ, BATCH, EMB)
    assert jnp.allclose(out, ref, atol=1e-6), "mismatch vs reference (eval mode)"

    # training-mode path: kept elements must equal scaled reference; drop rate ~ p
    out_train = positional_encoding(token_embedding, pos_embedding,
                                    dropout_p=DROPOUT_P, training=True, seed=42)
    out_train = jax.block_until_ready(out_train)
    assert out_train.shape == (SEQ, BATCH, EMB)

    ot = np.asarray(out_train)
    rf = np.asarray(ref) / (1.0 - DROPOUT_P)
    kept = ot != 0.0
    assert np.allclose(ot[kept], rf[kept], atol=1e-5, rtol=1e-5), \
        "kept values not scaled correctly"
    frac_kept = float(kept.mean())
    assert 0.6 < frac_kept <= 1.0, f"implausible keep fraction {frac_kept}"

    print("KERNEL_OK")
</pallas_src>

<mosaic_0001>
module attributes {stable_mosaic.version = 11 : i64} {
  func.func @_posenc_kernel(%arg0: i32, %arg1: memref<1xi32, #tpu.memory_space<smem>>, %arg2: memref<4x2x128xf32, #tpu.memory_space<vmem>>, %arg3: memref<4x1x128xf32, #tpu.memory_space<vmem>>, %arg4: memref<4x2x128xf32, #tpu.memory_space<vmem>>) attributes {dimension_semantics = [#tpu.dimension_semantics<parallel>], iteration_bounds = array<i64: 2>, scalar_prefetch = 1 : i64, scratch_operands = 0 : i64, tpu.core_type = #tpu.core_type<tc>, window_params = [{transform_indices = @transform_0, window_bounds = array<i64: 4, 2, 128>}, {transform_indices = @transform_1, window_bounds = array<i64: 4, 1, 128>}, {transform_indices = @transform_2, window_bounds = array<i64: 4, 2, 128>}]} {
    %c0 = arith.constant 0 : index
    %c0_0 = arith.constant 0 : index
    %c0_1 = arith.constant 0 : index
    %0 = vector.load %arg2[%c0, %c0_0, %c0_1] : memref<4x2x128xf32, #tpu.memory_space<vmem>>, vector<4x2x128xf32>
    %c0_2 = arith.constant 0 : index
    %c0_3 = arith.constant 0 : index
    %c0_4 = arith.constant 0 : index
    %1 = vector.load %arg3[%c0_2, %c0_3, %c0_4] : memref<4x1x128xf32, #tpu.memory_space<vmem>>, vector<4x1x128xf32>
    %2 = vector.broadcast %1 : vector<4x1x128xf32> to vector<4x2x128xf32>
    %3 = arith.addf %0, %2 : vector<4x2x128xf32>
    %c0_5 = arith.constant 0 : index
    %c0_6 = arith.constant 0 : index
    %c0_7 = arith.constant 0 : index
    %4 = vector.load %arg4[%c0_5, %c0_6, %c0_7] : memref<4x2x128xf32, #tpu.memory_space<vmem>>, vector<4x2x128xf32>
    tpu.vector_store %arg4[%c0_5, %c0_6, %c0_7], %3 {strides = array<i32>} : memref<4x2x128xf32, #tpu.memory_space<vmem>>, vector<4x2x128xf32>,
    return
  }
  func.func @transform_0(%arg0: i32, %arg1: memref<1xi32, #tpu.memory_space<smem>>) -> (i32, i32, i32) {
    %c0_i32 = arith.constant 0 : i32
    %c0_i32_0 = arith.constant 0 : i32
    %c0_i32_1 = arith.constant 0 : i32
    return %arg0, %c0_i32, %c0_i32_0 : i32, i32, i32
  }
  func.func @transform_1(%arg0: i32, %arg1: memref<1xi32, #tpu.memory_space<smem>>) -> (i32, i32, i32) {
    %c0_i32 = arith.constant 0 : i32
    %c0_i32_0 = arith.constant 0 : i32
    %c0_i32_1 = arith.constant 0 : i32
    return %arg0, %c0_i32, %c0_i32_0 : i32, i32, i32
  }
  func.func @transform_2(%arg0: i32, %arg1: memref<1xi32, #tpu.memory_space<smem>>) -> (i32, i32, i32) {
    %c0_i32 = arith.constant 0 : i32
    %c0_i32_0 = arith.constant 0 : i32
    %c0_i32_1 = arith.constant 0 : i32
    return %arg0, %c0_i32, %c0_i32_0 : i32, i32, i32
  }
}

</mosaic_0001>

<llo_original>
// kernel: tpu_custom_call.1
$region0: #{tpu_custom_call.1}
  #allocation0 [shape = 'u32[]', space=smem, size = 0x4, offset = 0x4, fixed_abs, tag = 'smem constant byte address 0x4 - core index']
  #allocation1 [shape = 'u32[144,128]{1,0:T(1,128)}', space=vmem, size = 0x12000, scoped, tag = 'internal scratch']
  #allocation2 [shape = 's32[1]{0}', space=sflag, size = 0x4, scoped, tag = 'scoped memory for tpu_custom_call.1']
  #allocation3 [shape = 's32[1]{0:T(128)S(6)}', space=smem, size = 0x200, scoped, tag = 'prefetched SMEM operand 0']
  %s0 = inlined_call_operand.<no memory space> [shape: s32[1], index: 0, kind: input, shape index: {}]
  %s1 = inlined_call_operand.hbm [shape: f32[8,2,128], index: 1, kind: input, shape index: {}]
  %s2 = inlined_call_operand.hbm [shape: f32[64,1,128], index: 2, kind: input, shape index: {}]
  %s3 = inlined_call_operand.hbm [shape: f32[8,2,128], index: 3, kind: output, shape index: {}]
  %s4 = sld [smem:[#allocation0]]
  $region49: #{tpu_custom_call.1} parent=0
    _
  %s6 = ssub.s32 1, %s4
  %s7 = scalar_select 0, %s6, %s4
  %8 = sst [smem:[#allocation3]] %s0
  $region1: #{tpu_custom_call.1} parent=0
    #allocation4 [shape = 'u8[8192]{0}', space=vmem, size = 0x2000, scoped, tag = 'input window, operand 1']
    #allocation5 [shape = 's32[2]{0}', space=sflag, size = 0x8, scoped, tag = 'scoped memory for tpu_custom_call.1']
    #allocation6 [shape = 's32[2]{0}', space=sflag, size = 0x8, scoped, tag = 'scoped memory for tpu_custom_call.1']
    #allocation7 [shape = 'u8[4096]{0}', space=vmem, size = 0x1000, scoped, tag = 'input window, operand 2']
    #allocation8 [shape = 's32[2]{0}', space=sflag, size = 0x8, scoped, tag = 'scoped memory for tpu_custom_call.1']
    #allocation9 [shape = 'u8[8192]{0}', space=vmem, size = 0x2000, scoped, tag = 'output window, operand 0']
    %9 = vsyncpa [#allocation5], 0
    %s10 = scalar_lea.sflag [#allocation5], 1
    %11 = vsyncpa %s10, 0
    %12 = vsyncpa [#allocation8], 0
    %s13 = scalar_lea.sflag [#allocation8], 1
    %14 = vsyncpa %s13, 0
    %15 = vsyncpa [#allocation6], 0
    %s16 = scalar_lea.sflag [#allocation6], 1
    %17 = vsyncpa %s16, 0
    loop: start=0, step=1, limit=4
    $region2: #{tpu_custom_call.1} parent=1 // loop_pre_header
      _
    $region3: #{tpu_custom_call.1} parent=1 // loop_header
      %s19 = sphi 0, %s23
      %p20 = scmp.ge.s32.totalorder %s19, 4
      %s29 = sphi 0, %s31
      %s32 = sphi 0, %s29
      %s33 = sphi 0, %s32
      %s49 = sphi 0, %s33
      %s55 = sphi 0, %s57
      %s58 = sphi 0, %s55
      %s59 = sphi 0, %s58
      %s75 = sphi 0, %s59
      %s81 = sphi 0, %s83
      %s84 = sphi 0, %s81
      %s85 = sphi 0, %s84
      %s101 = sphi 0, %s85
    $region4: #{tpu_custom_call.1} parent=1 // loop_header_branch
      %22 = sbr.rel (%p20) target = $region8
    $region5: #{tpu_custom_call.1} parent=1 // loop_body
      %s24 = ssub.s32 %s19, 1
      %s25 = ssub.s32 %s19, 2
      %s26 = sadd.s32 %s19, 1
      %s27 = ssub.s32 %s19, %s26
      %p28 = scmp.eq.s32.totalorder %s27, 0
      %s30 = sadd.s32 %s29, 1
      %s31 = scalar_select %p28, %s29, %s30
      %p34 = pneg %p28
      %p35 = scmp.eq.s32.totalorder %s19, 1
      %p36 = por %p34, %p35
      %p37 = scmp.ne.s32.totalorder %s29, %s32
      %p38 = scmp.eq.s32.totalorder %s19, 0
      %p39 = por %p37, %p38
      %p40 = scmp.ne.s32.totalorder %s29, %s32
      %p41 = scmp.eq.s32.totalorder %s24, 1
      %p42 = por %p40, %p41
      %p43 = scmp.ne.s32.totalorder %s32, %s33
      %p44 = scmp.eq.s32.totalorder %s24, 0
      %p45 = por %p43, %p44
      %p46 = scmp.ne.s32.totalorder %s32, %s33
      %p47 = scmp.eq.s32.totalorder %s25, 1
      %p48 = por %p46, %p47
      %p50 = scmp.ne.s32.totalorder %s33, %s49
      %p51 = scmp.eq.s32.totalorder %s25, 0
      %p52 = por %p50, %p51
      %s53 = ssub.s32 %s19, %s26
      %p54 = scmp.eq.s32.totalorder %s53, 0
      %s56 = sadd.s32 %s55, 1
      %s57 = scalar_select %p54, %s55, %s56
      %p60 = pneg %p54
      %p61 = scmp.eq.s32.totalorder %s19, 1
      %p62 = por %p60, %p61
      %p63 = scmp.ne.s32.totalorder %s55, %s58
      %p64 = scmp.eq.s32.totalorder %s19, 0
      %p65 = por %p63, %p64
      %p66 = scmp.ne.s32.totalorder %s55, %s58
      %p67 = scmp.eq.s32.totalorder %s24, 1
      %p68 = por %p66, %p67
      %p69 = scmp.ne.s32.totalorder %s58, %s59
      %p70 = scmp.eq.s32.totalorder %s24, 0
      %p71 = por %p69, %p70
      %p72 = scmp.ne.s32.totalorder %s58, %s59
      %p73 = scmp.eq.s32.totalorder %s25, 1
      %p74 = por %p72, %p73
      %p76 = scmp.ne.s32.totalorder %s59, %s75
      %p77 = scmp.eq.s32.totalorder %s25, 0
      %p78 = por %p76, %p77
      %s79 = ssub.s32 %s19, %s26
      %p80 = scmp.eq.s32.totalorder %s79, 0
      %s82 = sadd.s32 %s81, 1
      %s83 = scalar_select %p80, %s81, %s82
      %p86 = pneg %p80
      %p87 = scmp.eq.s32.totalorder %s19, 1
      %p88 = por %p86, %p87
      %p89 = scmp.ne.s32.totalorder %s81, %s84
      %p90 = scmp.eq.s32.totalorder %s19, 0
      %p91 = por %p89, %p90
      %p92 = scmp.ne.s32.totalorder %s81, %s84
      %p93 = scmp.eq.s32.totalorder %s24, 1
      %p94 = por %p92, %p93
      %p95 = scmp.ne.s32.totalorder %s84, %s85
      %p96 = scmp.eq.s32.totalorder %s24, 0
      %p97 = por %p95, %p96
      %p98 = scmp.ne.s32.totalorder %s84, %s85
      %p99 = scmp.eq.s32.totalorder %s25, 1
      %p100 = por %p98, %p99
      %p102 = scmp.ne.s32.totalorder %s85, %s101
      %p103 = scmp.eq.s32.totalorder %s25, 0
      %p104 = por %p102, %p103
      %p105 = scmp.le.s32.totalorder 1, %s19
      %p106 = scmp.lt.s32.totalorder %s19, 3
      %p107 = pnand %p105, %p106
      %p108 = pneg %p107
      // Predicated region
      $region9: #{tpu_custom_call.1} parent=5 // pred_check
        _
      $region10: #{tpu_custom_call.1} parent=5 // pred_check_branch
        %110 = sbr.rel (%p107) target = $region12
      $region11: #{tpu_custom_call.1} parent=5 // pred_region
        %s111 = ssub.s32 %s19, 1
      $region12: #{tpu_custom_call.1} parent=5 // pred_fallthru
        _
      %p112 = scmp.lt.s32.totalorder %s19, 2
      // Predicated region
      $region13: #{tpu_custom_call.1} parent=5 // pred_check
        %p113 = pneg %p112
      $region14: #{tpu_custom_call.1} parent=5 // pred_check_branch
        %115 = sbr.rel (%p113) target = $region16
      $region15: #{tpu_custom_call.1} parent=5 // pred_region
        // Predicated region
        $region17: #{tpu_custom_call.1} parent=15 // pred_check
          %p116 = pneg %p39
        $region18: #{tpu_custom_call.1} parent=15 // pred_check_branch
          %118 = sbr.rel (%p116) target = $region20
        $region19: #{tpu_custom_call.1} parent=15 // pred_region
          %s119 = sand.u32 %s29, 1
          %s120 = scalar_lea.sflag [#allocation5], %s119
          %s121 = sand.u32 %s29, 1
          %s122 = smul.addr %s121, 8
          %s123 = scalar_lea.vmem [#allocation4], %s122
          %s124 = smul.u32 4, %s19
          %s126 = ssub.s32 128, 128
          %127 = vsyncadd %s120, %s126
          %s128 = smul.addr %s124, 32
          %s129 = scalar_lea.hbm %s1, %s128
          %s130 = sshll.u32 %s123, 4
          %s131 = int_to_ptr.vmem [resolvable:$true] %s130
          %136 = dma.hbm_to_vmem [thread:$0]  %s129, 128, %s131, %s120, 32, 32, 2
        $region20: #{tpu_custom_call.1} parent=15 // pred_fallthru
          _
        // Predicated region
        $region21: #{tpu_custom_call.1} parent=15 // pred_check
          %p137 = pneg %p65
        $region22: #{tpu_custom_call.1} parent=15 // pred_check_branch
          %139 = sbr.rel (%p137) target = $region24
        $region23: #{tpu_custom_call.1} parent=15 // pred_region
          %s140 = sand.u32 %s55, 1
          %s141 = scalar_lea.sflag [#allocation8], %s140
          %s142 = sand.u32 %s55, 1
          %s143 = smul.addr %s142, 4
          %s144 = scalar_lea.vmem [#allocation7], %s143
          %s145 = smul.u32 4, %s19
          %s147 = ssub.s32 64, 64
          %148 = vsyncadd %s141, %s147
          %s149 = smul.addr %s145, 16
          %s150 = scalar_lea.hbm %s2, %s149
          %s151 = sshll.u32 %s144, 4
          %s152 = int_to_ptr.vmem [resolvable:$true] %s151
          %157 = dma.hbm_to_vmem [thread:$0]  %s150, 64, %s152, %s141, 16, 16, 1
        $region24: #{tpu_custom_call.1} parent=15 // pred_fallthru
          _
      $region16: #{tpu_custom_call.1} parent=5 // pred_fallthru
        _
      %p158 = scmp.le.s32.totalorder 1, %s19
      %p159 = scmp.lt.s32.totalorder %s19, 3
      %p160 = pnand %p158, %p159
      %p161 = pneg %p160
      // Predicated region
      $region25: #{tpu_custom_call.1} parent=5 // pred_check
        _
      $region26: #{tpu_custom_call.1} parent=5 // pred_check_branch
        %163 = sbr.rel (%p160) target = $region28
      $region27: #{tpu_custom_call.1} parent=5 // pred_region
        %s164 = ssub.s32 %s19, 1
        %s165 = sand.u32 %s32, 1
        %s166 = scalar_lea.sflag [#allocation5], %s165
        %s167 = sand.u32 %s32, 1
        %s168 = smul.addr %s167, 8
        %s169 = scalar_lea.vmem [#allocation4], %s168
        // Predicated region
        $region29: #{tpu_custom_call.1} parent=27 // pred_check
          %p170 = pneg %p45
        $region30: #{tpu_custom_call.1} parent=27 // pred_check_branch
          %172 = sbr.rel (%p170) target = $region32
        $region31: #{tpu_custom_call.1} parent=27 // pred_region
          %173 = dma.done %s166, 128
        $region32: #{tpu_custom_call.1} parent=27 // pred_fallthru
          _
        %s174 = sand.u32 %s58, 1
        %s175 = scalar_lea.sflag [#allocation8], %s174
        %s176 = sand.u32 %s58, 1
        %s177 = smul.addr %s176, 4
        %s178 = scalar_lea.vmem [#allocation7], %s177
        // Predicated region
        $region33: #{tpu_custom_call.1} parent=27 // pred_check
          %p179 = pneg %p71
        $region34: #{tpu_custom_call.1} parent=27 // pred_check_branch
          %181 = sbr.rel (%p179) target = $region36
        $region35: #{tpu_custom_call.1} parent=27 // pred_region
          %182 = dma.done %s175, 64
        $region36: #{tpu_custom_call.1} parent=27 // pred_fallthru
          _
        %s183 = sand.u32 %s32, 1
        %s184 = scalar_lea.sflag [#allocation5], %s183
        %s185 = sand.u32 %s32, 1
        %s186 = smul.addr %s185, 8
        %s187 = scalar_lea.vmem [#allocation4], %s186
        %p188 = pneg %p45
        %p189 = pneg %p42
        %s190 = sand.u32 %s58, 1
        %s191 = scalar_lea.sflag [#allocation8], %s190
        %s192 = sand.u32 %s58, 1
        %s193 = smul.addr %s192, 4
        %s194 = scalar_lea.vmem [#allocation7], %s193
        %p195 = pneg %p71
        %p196 = pneg %p68
        %p197 = pneg %p97
        %p198 = pneg %p94
        %s199 = sand.u32 %s84, 1
        %s200 = scalar_lea.sflag [#allocation6], %s199
        %s201 = sand.u32 %s84, 1
        %s202 = smul.addr %s201, 8
        %s203 = scalar_lea.vmem [#allocation9], %s202
        %s204 = smul.u32 4, %s24
        %s205 = smul.u32 4, %s24
        %s206 = smul.u32 4, %s24
        %v207 = vld [vmem:[%s169] sm:$0x3]
        %v208 = vld [vmem:[%s169 + $0x2] sm:$0x3]
        %v209 = vld [vmem:[%s169 + $0x4] sm:$0x3]
        %v210 = vld [vmem:[%s169 + $0x6] sm:$0x3]
        %v211 = vld [vmem:[%s178] sm:$0x1]
        %v212 = vld [vmem:[%s178 + $0x1] sm:$0x1]
        %v213 = vld [vmem:[%s178 + $0x2] sm:$0x1]
        %v214 = vld [vmem:[%s178 + $0x3] sm:$0x1]
        %v219 = vlaneseq
        %v220 = vshrl.u32 %v219, 7
        %v221 = vsub.s32 0, %v220
        %v222 = vrot.slane %v211, %v221
        %v223 = vlaneseq
        %v224 = vshrl.u32 %v223, 7
        %v225 = vsub.s32 0, %v224
        %v226 = vrot.slane %v212, %v225
        %v227 = vlaneseq
        %v228 = vshrl.u32 %v227, 7
        %v229 = vsub.s32 0, %v228
        %v230 = vrot.slane %v213, %v229
        %v231 = vlaneseq
        %v232 = vshrl.u32 %v231, 7
        %v233 = vsub.s32 0, %v232
        %v234 = vrot.slane %v214, %v233
        %v239 = vadd.f32 %v207, %v222
        %v240 = vadd.f32 %v208, %v226
        %v241 = vadd.f32 %v209, %v230
        %v242 = vadd.f32 %v210, %v234
        %243 = vst [vmem:[%s203] sm:$0x3] %v239
        %244 = vst [vmem:[%s203 + $0x2] sm:$0x3] %v240
        %245 = vst [vmem:[%s203 + $0x4] sm:$0x3] %v241
        %246 = vst [vmem:[%s203 + $0x6] sm:$0x3] %v242
        %s247 = sand.u32 %s84, 1
        %s248 = scalar_lea.sflag [#allocation6], %s247
        %s249 = sand.u32 %s84, 1
        %s250 = smul.addr %s249, 8
        %s251 = scalar_lea.vmem [#allocation9], %s250
        // Predicated region
        $region37: #{tpu_custom_call.1} parent=27 // pred_check
          %p252 = pneg %p94
        $region38: #{tpu_custom_call.1} parent=27 // pred_check_branch
          %254 = sbr.rel (%p252) target = $region40
        $region39: #{tpu_custom_call.1} parent=27 // pred_region
          %s255 = smul.u32 4, %s24
          %s257 = ssub.s32 128, 128
          %258 = vsyncadd %s248, %s257
          %s259 = smul.addr %s255, 32
          %s260 = scalar_lea.hbm %s3, %s259
          %s261 = sshll.u32 %s251, 4
          %s262 = int_to_ptr.vmem [resolvable:$true] %s261
          %267 = dma.vmem_to_hbm [thread:$0]  %s262, 128, %s260, %s248, 32, 32, 2
        $region40: #{tpu_custom_call.1} parent=27 // pred_fallthru
          _
      $region28: #{tpu_custom_call.1} parent=5 // pred_fallthru
        _
      %p268 = scmp.le.s32.totalorder 2, %s19
      // Predicated region
      $region41: #{tpu_custom_call.1} parent=5 // pred_check
        %p269 = pneg %p268
      $region42: #{tpu_custom_call.1} parent=5 // pred_check_branch
        %271 = sbr.rel (%p269) target = $region44
      $region43: #{tpu_custom_call.1} parent=5 // pred_region
        %s272 = ssub.s32 %s19, 2
        // Predicated region
        $region45: #{tpu_custom_call.1} parent=43 // pred_check
          %p273 = pneg %p100
        $region46: #{tpu_custom_call.1} parent=43 // pred_check_branch
          %275 = sbr.rel (%p273) target = $region48
        $region47: #{tpu_custom_call.1} parent=43 // pred_region
          %s276 = sand.u32 %s85, 1
          %s277 = scalar_lea.sflag [#allocation6], %s276
          %s278 = sand.u32 %s85, 1
          %s279 = smul.addr %s278, 8
          %s280 = scalar_lea.vmem [#allocation9], %s279
          %281 = dma.done %s277, 128
        $region48: #{tpu_custom_call.1} parent=43 // pred_fallthru
          _
      $region44: #{tpu_custom_call.1} parent=5 // pred_fallthru
        _
    $region6: #{tpu_custom_call.1} parent=1 // loop_footer
      %s23 = sadd.s32 1, %s19
    $region7: #{tpu_custom_call.1} parent=1 // loop_footer_branch
      %18 = sbr.rel target = $region3
    $region8: #{tpu_custom_call.1} parent=1 // loop_exit
      _
    %282 = vsyncpa [#allocation5], 1
    %s283 = scalar_lea.sflag [#allocation5], 1
    %284 = vsyncpa %s283, 1
    %285 = vsyncpa [#allocation8], 1
    %s286 = scalar_lea.sflag [#allocation8], 1
    %287 = vsyncpa %s286, 1
    %288 = vsyncpa [#allocation6], 1
    %s289 = scalar_lea.sflag [#allocation6], 1
    %290 = vsyncpa %s289, 1

</llo_original>
